<compile_context>
chip_gen: v6e
topology: v6e:2x2x1
jax: 0.10.0
libtpu: 0.0.40
codegen_flags: <defaults>
</compile_context>

<pallas_src>
import functools

import jax
import jax.numpy as jnp
from jax.experimental import pallas as pl
from jax.experimental.pallas import tpu as pltpu

BN_EPS = 1e-5
LANE = 128


def _round_up(n, m=LANE):
    return ((n + m - 1) // m) * m


# ----------------------------------------------------------------------------
# Fused kernel (factory over the number of hidden blocks)
# ----------------------------------------------------------------------------
def _make_fused_kernel(n_hidden):
    """Args: x_ref, w_stack_ref, gb_stack_ref, w_out_ref, b_out_ref, o_ref."""

    def kernel(x_ref, w_ref, gb_ref, w_out_ref, b_out_ref, o_ref):
        batch = x_ref.shape[0]
        inv_b = 1.0 / batch

        h = x_ref[...]                                     # (batch, D) f32
        for i in range(n_hidden):
            w = w_ref[i]                                   # (D, D) static index
            gamma = gb_ref[2 * i:2 * i + 1, :]             # (1, D)
            beta = gb_ref[2 * i + 1:2 * i + 2, :]          # (1, D)

            # Linear (hidden bias dropped: cancels exactly under mean-centering)
            z = jnp.dot(h, w, preferred_element_type=jnp.float32)

            # BatchNorm1d training-mode stats.  Both reductions depend only
            # on z; var = E[z^2] - mean^2 (biased variance).
            mean = jnp.sum(z, axis=0, keepdims=True) * inv_b
            ex2 = jnp.sum(z * z, axis=0, keepdims=True) * inv_b
            var = ex2 - mean * mean

            # Fold gamma into the scale; single scale/shift pass + ReLU.
            scale = gamma * jax.lax.rsqrt(var + BN_EPS)
            shift = beta - mean * scale
            h = jnp.maximum(z * scale + shift, 0.0)

        # Output projection (bias kept, output width left unpadded).
        z = jnp.dot(h, w_out_ref[...], preferred_element_type=jnp.float32)
        o_ref[...] = (z + b_out_ref[...]).astype(o_ref.dtype)

    return kernel


# ----------------------------------------------------------------------------
# Parameter init (mirrors MLP_G.init_weights: N(0, 0.02) weights incl. BN
# gamma, zero biases / beta)
# ----------------------------------------------------------------------------
def init_mlp_g_params(key, ninput, noutput, layers_str, init_std=0.02):
    layer_sizes = [ninput] + [int(s) for s in layers_str.split('-')]
    params = {"hidden": [], "out": None}
    for i in range(len(layer_sizes) - 1):
        fan_in, fan_out = layer_sizes[i], layer_sizes[i + 1]
        key, k_w, k_g = jax.random.split(key, 3)
        w = init_std * jax.random.normal(k_w, (fan_in, fan_out), jnp.float32)
        b = jnp.zeros((fan_out,), jnp.float32)   # kept for fidelity; cancels in BN
        gamma = init_std * jax.random.normal(k_g, (fan_out,), jnp.float32)
        beta = jnp.zeros((fan_out,), jnp.float32)
        params["hidden"].append((w, b, gamma, beta))
    key, k_w = jax.random.split(key)
    w_out = init_std * jax.random.normal(
        k_w, (layer_sizes[-1], noutput), jnp.float32)
    b_out = jnp.zeros((noutput,), jnp.float32)
    params["out"] = (w_out, b_out)
    return params


# ----------------------------------------------------------------------------
# One-time param preparation: pad to the common lane-dense width D and stack.
# ----------------------------------------------------------------------------
def prepare_mlp_g_params(params, ninput):
    hidden = params["hidden"]
    n_hidden = len(hidden)
    dims = [ninput] + [w.shape[1] for (w, _b, _g, _bt) in hidden]
    D = max(_round_up(d) for d in dims)

    w_blocks, gb_rows = [], []
    for (w, _b, gamma, beta) in hidden:
        w_p = jnp.zeros((D, D), jnp.float32).at[:w.shape[0], :w.shape[1]].set(w)
        w_blocks.append(w_p)
        gb_rows.append(jnp.zeros((D,), jnp.float32).at[:gamma.shape[0]].set(gamma))
        gb_rows.append(jnp.zeros((D,), jnp.float32).at[:beta.shape[0]].set(beta))
    w_stack = jnp.stack(w_blocks)          # (n_hidden, D, D)
    gb_stack = jnp.stack(gb_rows)          # (2*n_hidden, D)

    w_out, b_out = params["out"]
    noutput = w_out.shape[1]
    w_out_p = jnp.zeros((D, noutput), jnp.float32).at[:w_out.shape[0], :].set(w_out)
    b_out_p = b_out.reshape(1, noutput)

    arrays = dict(w_stack=w_stack, gb_stack=gb_stack, w_out=w_out_p, b_out=b_out_p)
    return arrays, D, n_hidden


# ----------------------------------------------------------------------------
# Forward: one fused, gridless pallas_call (all params resident in VMEM).
# ----------------------------------------------------------------------------
@functools.partial(jax.jit, static_argnames=("n_hidden", "d_pad"))
def _fused_forward(x, w_stack, gb_stack, w_out, b_out, *, n_hidden, d_pad):
    batch, ninput = x.shape
    noutput = w_out.shape[1]

    x_p = x if ninput == d_pad else jnp.pad(x, ((0, 0), (0, d_pad - ninput)))

    # Advisory cost estimate (static Python ints under jit).
    flops = (n_hidden * (2 * batch * d_pad * d_pad + 10 * batch * d_pad)
             + 2 * batch * d_pad * noutput + batch * noutput)
    bytes_accessed = 4 * (x_p.size + w_stack.size + gb_stack.size
                          + w_out.size + b_out.size + batch * noutput)
    cost = pl.CostEstimate(flops=int(flops),
                           transcendentals=int(n_hidden * d_pad),
                           bytes_accessed=int(bytes_accessed))

    vmem = pl.BlockSpec(memory_space=pltpu.MemorySpace.VMEM)
    return pl.pallas_call(
        _make_fused_kernel(n_hidden),
        out_shape=jax.ShapeDtypeStruct((batch, noutput), jnp.float32),
        in_specs=[vmem] * 5,
        out_specs=vmem,
        cost_estimate=cost,
    )(x_p, w_stack, gb_stack, w_out, b_out)


def mlp_g_forward(prepared, x):
    arrays, d_pad, n_hidden = prepared
    return _fused_forward(x, arrays["w_stack"], arrays["gb_stack"],
                          arrays["w_out"], arrays["b_out"],
                          n_hidden=n_hidden, d_pad=d_pad)


# ----------------------------------------------------------------------------
# Pure-JAX reference (unpadded, with biases) for a correctness sanity check
# ----------------------------------------------------------------------------
def mlp_g_reference(params, x):
    for (w, b, gamma, beta) in params["hidden"]:
        z = x @ w + b
        mean = jnp.mean(z, axis=0, keepdims=True)
        var = jnp.mean((z - mean) ** 2, axis=0, keepdims=True)
        x = jnp.maximum(
            (z - mean) * jax.lax.rsqrt(var + BN_EPS) * gamma + beta, 0.0)
    w_out, b_out = params["out"]
    return x @ w_out + b_out


# TODO(synk): BatchNorm1d running-mean/var buffer updates (momentum=0.1) are a
# training-time side effect only and are not produced by this forward kernel.

if __name__ == "__main__":
    key = jax.random.PRNGKey(0)
    k_in, k_par = jax.random.split(key)

    batch, ninput, noutput = 8, 32, 16
    layers_str = "64-64"

    x = jax.random.normal(k_in, (batch, ninput), jnp.float32)
    params = init_mlp_g_params(k_par, ninput, noutput, layers_str)

    prepared = prepare_mlp_g_params(params, ninput)   # one-time pad + stack

    out = mlp_g_forward(prepared, x)
    jax.block_until_ready(out)

    assert out.shape == (batch, noutput)

    ref = mlp_g_reference(params, x)
    assert jnp.allclose(out, ref, atol=1e-3, rtol=1e-3), "kernel/reference mismatch"

    print("KERNEL_OK")
</pallas_src>

<mosaic_0001>
module attributes {stable_mosaic.version = 11 : i64} {
  func.func @kernel(%arg0: memref<8x128xf32, #tpu.memory_space<vmem>>, %arg1: memref<2x128x128xf32, #tpu.memory_space<vmem>>, %arg2: memref<4x128xf32, #tpu.memory_space<vmem>>, %arg3: memref<128x16xf32, #tpu.memory_space<vmem>>, %arg4: memref<1x16xf32, #tpu.memory_space<vmem>>, %arg5: memref<8x16xf32, #tpu.memory_space<vmem>>) attributes {dimension_semantics = [], scalar_prefetch = 0 : i64, scratch_operands = 0 : i64, tpu.core_type = #tpu.core_type<tc>} {
    %c0 = arith.constant 0 : index
    %c0_0 = arith.constant 0 : index
    %0 = vector.load %arg0[%c0, %c0_0] : memref<8x128xf32, #tpu.memory_space<vmem>>, vector<8x128xf32>
    %c0_1 = arith.constant 0 : index
    %c0_2 = arith.constant 0 : index
    %c0_3 = arith.constant 0 : index
    %1 = vector.load %arg1[%c0_1, %c0_2, %c0_3] : memref<2x128x128xf32, #tpu.memory_space<vmem>>, vector<1x128x128xf32>
    %2 = vector.shape_cast %1 : vector<1x128x128xf32> to vector<128x128xf32>
    %c0_4 = arith.constant 0 : index
    %c0_5 = arith.constant 0 : index
    %3 = vector.load %arg2[%c0_4, %c0_5] : memref<4x128xf32, #tpu.memory_space<vmem>>, vector<1x128xf32>
    %c1 = arith.constant 1 : index
    %c0_6 = arith.constant 0 : index
    %4 = vector.load %arg2[%c1, %c0_6] : memref<4x128xf32, #tpu.memory_space<vmem>>, vector<1x128xf32>
    %cst = arith.constant dense<0.000000e+00> : vector<8x128xf32>
    %5 = tpu.matmul %0, %2, %cst {dimension_numbers = #tpu.dot_dimension_numbers<[1], [0], [0], [1], [0, 0, 1, 1], [], []>} : vector<8x128xf32>, vector<128x128xf32>, vector<8x128xf32> -> vector<8x128xf32>
    %cst_7 = arith.constant dense<0.000000e+00> : vector<128xf32>
    %6 = vector.multi_reduction <add>, %5, %cst_7 [0] : vector<8x128xf32> to vector<128xf32>
    %7 = vector.shape_cast %6 : vector<128xf32> to vector<1x128xf32>
    %cst_8 = arith.constant 1.250000e-01 : f32
    %8 = vector.broadcast %cst_8 : f32 to vector<1x128xf32>
    %9 = arith.mulf %7, %8 : vector<1x128xf32>
    %10 = arith.mulf %5, %5 : vector<8x128xf32>
    %cst_9 = arith.constant dense<0.000000e+00> : vector<128xf32>
    %11 = vector.multi_reduction <add>, %10, %cst_9 [0] : vector<8x128xf32> to vector<128xf32>
    %12 = vector.shape_cast %11 : vector<128xf32> to vector<1x128xf32>
    %cst_10 = arith.constant 1.250000e-01 : f32
    %13 = vector.broadcast %cst_10 : f32 to vector<1x128xf32>
    %14 = arith.mulf %12, %13 : vector<1x128xf32>
    %15 = arith.mulf %9, %9 : vector<1x128xf32>
    %16 = arith.subf %14, %15 : vector<1x128xf32>
    %cst_11 = arith.constant 9.99999974E-6 : f32
    %17 = vector.broadcast %cst_11 : f32 to vector<1x128xf32>
    %18 = arith.addf %16, %17 : vector<1x128xf32>
    %19 = math.rsqrt %18 : vector<1x128xf32>
    %20 = arith.mulf %3, %19 : vector<1x128xf32>
    %21 = arith.mulf %9, %20 : vector<1x128xf32>
    %22 = arith.subf %4, %21 : vector<1x128xf32>
    %23 = vector.broadcast %20 : vector<1x128xf32> to vector<8x128xf32>
    %24 = arith.mulf %5, %23 : vector<8x128xf32>
    %25 = vector.broadcast %22 : vector<1x128xf32> to vector<8x128xf32>
    %26 = arith.addf %24, %25 : vector<8x128xf32>
    %cst_12 = arith.constant 0.000000e+00 : f32
    %27 = vector.broadcast %cst_12 : f32 to vector<8x128xf32>
    %28 = arith.maximumf %26, %27 : vector<8x128xf32>
    %c1_13 = arith.constant 1 : index
    %c0_14 = arith.constant 0 : index
    %c0_15 = arith.constant 0 : index
    %29 = vector.load %arg1[%c1_13, %c0_14, %c0_15] : memref<2x128x128xf32, #tpu.memory_space<vmem>>, vector<1x128x128xf32>
    %30 = vector.shape_cast %29 : vector<1x128x128xf32> to vector<128x128xf32>
    %c2 = arith.constant 2 : index
    %c0_16 = arith.constant 0 : index
    %31 = vector.load %arg2[%c2, %c0_16] : memref<4x128xf32, #tpu.memory_space<vmem>>, vector<1x128xf32>
    %c3 = arith.constant 3 : index
    %c0_17 = arith.constant 0 : index
    %32 = vector.load %arg2[%c3, %c0_17] : memref<4x128xf32, #tpu.memory_space<vmem>>, vector<1x128xf32>
    %cst_18 = arith.constant dense<0.000000e+00> : vector<8x128xf32>
    %33 = tpu.matmul %28, %30, %cst_18 {dimension_numbers = #tpu.dot_dimension_numbers<[1], [0], [0], [1], [0, 0, 1, 1], [], []>} : vector<8x128xf32>, vector<128x128xf32>, vector<8x128xf32> -> vector<8x128xf32>
    %cst_19 = arith.constant dense<0.000000e+00> : vector<128xf32>
    %34 = vector.multi_reduction <add>, %33, %cst_19 [0] : vector<8x128xf32> to vector<128xf32>
    %35 = vector.shape_cast %34 : vector<128xf32> to vector<1x128xf32>
    %cst_20 = arith.constant 1.250000e-01 : f32
    %36 = vector.broadcast %cst_20 : f32 to vector<1x128xf32>
    %37 = arith.mulf %35, %36 : vector<1x128xf32>
    %38 = arith.mulf %33, %33 : vector<8x128xf32>
    %cst_21 = arith.constant dense<0.000000e+00> : vector<128xf32>
    %39 = vector.multi_reduction <add>, %38, %cst_21 [0] : vector<8x128xf32> to vector<128xf32>
    %40 = vector.shape_cast %39 : vector<128xf32> to vector<1x128xf32>
    %cst_22 = arith.constant 1.250000e-01 : f32
    %41 = vector.broadcast %cst_22 : f32 to vector<1x128xf32>
    %42 = arith.mulf %40, %41 : vector<1x128xf32>
    %43 = arith.mulf %37, %37 : vector<1x128xf32>
    %44 = arith.subf %42, %43 : vector<1x128xf32>
    %cst_23 = arith.constant 9.99999974E-6 : f32
    %45 = vector.broadcast %cst_23 : f32 to vector<1x128xf32>
    %46 = arith.addf %44, %45 : vector<1x128xf32>
    %47 = math.rsqrt %46 : vector<1x128xf32>
    %48 = arith.mulf %31, %47 : vector<1x128xf32>
    %49 = arith.mulf %37, %48 : vector<1x128xf32>
    %50 = arith.subf %32, %49 : vector<1x128xf32>
    %51 = vector.broadcast %48 : vector<1x128xf32> to vector<8x128xf32>
    %52 = arith.mulf %33, %51 : vector<8x128xf32>
    %53 = vector.broadcast %50 : vector<1x128xf32> to vector<8x128xf32>
    %54 = arith.addf %52, %53 : vector<8x128xf32>
    %cst_24 = arith.constant 0.000000e+00 : f32
    %55 = vector.broadcast %cst_24 : f32 to vector<8x128xf32>
    %56 = arith.maximumf %54, %55 : vector<8x128xf32>
    %c0_25 = arith.constant 0 : index
    %c0_26 = arith.constant 0 : index
    %57 = vector.load %arg3[%c0_25, %c0_26] : memref<128x16xf32, #tpu.memory_space<vmem>>, vector<128x16xf32>
    %cst_27 = arith.constant dense<0.000000e+00> : vector<8x16xf32>
    %58 = tpu.matmul %56, %57, %cst_27 {dimension_numbers = #tpu.dot_dimension_numbers<[1], [0], [0], [1], [0, 0, 1, 1], [], []>} : vector<8x128xf32>, vector<128x16xf32>, vector<8x16xf32> -> vector<8x16xf32>
    %c0_28 = arith.constant 0 : index
    %c0_29 = arith.constant 0 : index
    %59 = vector.load %arg4[%c0_28, %c0_29] : memref<1x16xf32, #tpu.memory_space<vmem>>, vector<1x16xf32>
    %60 = vector.broadcast %59 : vector<1x16xf32> to vector<8x16xf32>
    %61 = arith.addf %58, %60 : vector<8x16xf32>
    %c0_30 = arith.constant 0 : index
    %c0_31 = arith.constant 0 : index
    %62 = vector.load %arg5[%c0_30, %c0_31] : memref<8x16xf32, #tpu.memory_space<vmem>>, vector<8x16xf32>
    tpu.vector_store %arg5[%c0_30, %c0_31], %61 {strides = array<i32>} : memref<8x16xf32, #tpu.memory_space<vmem>>, vector<8x16xf32>,
    return
  }
}

</mosaic_0001>

<llo_original>
// kernel: _fused_forward.1
$region0: #{_fused_forward.1}
  #allocation0 [shape = 'u32[]', space=smem, size = 0x4, offset = 0x4, fixed_abs, tag = 'smem constant byte address 0x4 - core index']
  #allocation1 [shape = 'u32[144,128]{1,0:T(1,128)}', space=vmem, size = 0x12000, scoped, tag = 'internal scratch']
  %s0 = inlined_call_operand.vmem [shape: f32[8,128], index: 0, kind: input, shape index: {}]
  %s1 = inlined_call_operand.hbm [shape: f32[2,128,128], index: 1, kind: input, shape index: {}]
  %s2 = inlined_call_operand.vmem [shape: f32[4,128], index: 2, kind: input, shape index: {}]
  %s3 = inlined_call_operand.vmem [shape: f32[128,16], index: 3, kind: input, shape index: {}]
  %s4 = inlined_call_operand.vmem [shape: f32[1,16], index: 4, kind: input, shape index: {}]
  %s5 = inlined_call_operand.hbm [shape: f32[8,16], index: 5, kind: output, shape index: {}]
  %s6 = sld [smem:[#allocation0]]
  $region34: #{_fused_forward.1} parent=0
    _
  %s8 = ssub.s32 1, %s6
  %s9 = scalar_select 0, %s8, %s6
  $region1: #{_fused_forward.1} parent=0
    #allocation2 [shape = 'u8[131072]{0}', space=vmem, size = 0x20000, scoped, tag = 'input window, operand 1, single buffered']
    #allocation3 [shape = 's32[1]{0}', space=sflag, size = 0x4, scoped, tag = 'scoped memory for _fused_forward.1']
    #allocation4 [shape = 's32[1]{0}', space=sflag, size = 0x4, scoped, tag = 'scoped memory for _fused_forward.1']
    #allocation5 [shape = 'u8[4096]{0}', space=vmem, size = 0x1000, scoped, tag = 'output window, operand 0, single buffered']
    %10 = vsyncpa [#allocation3], 0
    %11 = vsyncpa [#allocation4], 0
    // Predicated region
    $region2: #{_fused_forward.1} parent=1 // pred_check
      _
    $region3: #{_fused_forward.1} parent=1 // pred_check_branch
      %13 = sbr.rel (0) target = $region5
    $region4: #{_fused_forward.1} parent=1 // pred_region
      _
    $region5: #{_fused_forward.1} parent=1 // pred_fallthru
      _
    // Predicated region
    $region6: #{_fused_forward.1} parent=1 // pred_check
      _
    $region7: #{_fused_forward.1} parent=1 // pred_check_branch
      %15 = sbr.rel (0) target = $region9
    $region8: #{_fused_forward.1} parent=1 // pred_region
      %s17 = ssub.s32 4096, 4096
      %18 = vsyncadd [#allocation3], %s17
      %s19 = sshll.u32 [#allocation2], 4
      %s20 = int_to_ptr.vmem [resolvable:$true] %s19
      %25 = dma.hbm_to_vmem [thread:$0]  %s1, 4096, %s20, [#allocation3], 128, 128, 8
    $region9: #{_fused_forward.1} parent=1 // pred_fallthru
      _
    // Predicated region
    $region10: #{_fused_forward.1} parent=1 // pred_check
      _
    $region11: #{_fused_forward.1} parent=1 // pred_check_branch
      %27 = sbr.rel (0) target = $region13
    $region12: #{_fused_forward.1} parent=1 // pred_region
      _
    $region13: #{_fused_forward.1} parent=1 // pred_fallthru
      _
    // Predicated region
    $region14: #{_fused_forward.1} parent=1 // pred_check
      _
    $region15: #{_fused_forward.1} parent=1 // pred_check_branch
      %29 = sbr.rel (0) target = $region17
    $region16: #{_fused_forward.1} parent=1 // pred_region
      _
    $region17: #{_fused_forward.1} parent=1 // pred_fallthru
      _
    // Predicated region
    $region18: #{_fused_forward.1} parent=1 // pred_check
      _
    $region19: #{_fused_forward.1} parent=1 // pred_check_branch
      %31 = sbr.rel (0) target = $region21
    $region20: #{_fused_forward.1} parent=1 // pred_region
      _
    $region21: #{_fused_forward.1} parent=1 // pred_fallthru
      _
    // Predicated region
    $region22: #{_fused_forward.1} parent=1 // pred_check
      _
    $region23: #{_fused_forward.1} parent=1 // pred_check_branch
      %33 = sbr.rel (0) target = $region25
    $region24: #{_fused_forward.1} parent=1 // pred_region
      %34 = dma.done [#allocation3], 4096
    $region25: #{_fused_forward.1} parent=1 // pred_fallthru
      _
    %v35 = vld [vmem:[%s0] sm:$0xff]
    %v36 = vld [vmem:[#allocation2] sm:$0xff]
    %v37 = vld [vmem:[#allocation2 + $0x8] sm:$0xff]
    %v38 = vld [vmem:[#allocation2 + $0x10] sm:$0xff]
    %v39 = vld [vmem:[#allocation2 + $0x18] sm:$0xff]
    %v40 = vld [vmem:[#allocation2 + $0x20] sm:$0xff]
    %v41 = vld [vmem:[#allocation2 + $0x28] sm:$0xff]
    %v42 = vld [vmem:[#allocation2 + $0x30] sm:$0xff]
    %v43 = vld [vmem:[#allocation2 + $0x38] sm:$0xff]
    %v44 = vld [vmem:[#allocation2 + $0x40] sm:$0xff]
    %v45 = vld [vmem:[#allocation2 + $0x48] sm:$0xff]
    %v46 = vld [vmem:[#allocation2 + $0x50] sm:$0xff]
    %v47 = vld [vmem:[#allocation2 + $0x58] sm:$0xff]
    %v48 = vld [vmem:[#allocation2 + $0x60] sm:$0xff]
    %v49 = vld [vmem:[#allocation2 + $0x68] sm:$0xff]
    %v50 = vld [vmem:[#allocation2 + $0x70] sm:$0xff]
    %v51 = vld [vmem:[#allocation2 + $0x78] sm:$0xff]
    %v52 = vld [vmem:[%s2] sm:$0x1]
    %v53 = vld [vmem:[%s2 + $0x1] sm:$0x1]
    %54 = vmatprep.subr.mxu0 0.0
    %55 = vmatpush1.msra.mxu0 %v51
    %56 = vmatprep.subr.mxu0 0.0
    %57 = vmatpush1.msra.mxu0 %v50
    %58 = vmatprep.subr.mxu0 0.0
    %59 = vmatpush1.msra.mxu0 %v49
    %60 = vmatprep.subr.mxu0 0.0
    %61 = vmatpush1.msra.mxu0 %v48
    %62 = vmatprep.subr.mxu0 0.0
    %63 = vmatpush1.msra.mxu0 %v47
    %64 = vmatprep.subr.mxu0 0.0
    %65 = vmatpush1.msra.mxu0 %v46
    %66 = vmatprep.subr.mxu0 0.0
    %67 = vmatpush1.msra.mxu0 %v45
    %68 = vmatprep.subr.mxu0 0.0
    %69 = vmatpush1.msra.mxu0 %v44
    %70 = vmatprep.subr.mxu0 0.0
    %71 = vmatpush1.msra.mxu0 %v43
    %72 = vmatprep.subr.mxu0 0.0
    %73 = vmatpush1.msra.mxu0 %v42
    %74 = vmatprep.subr.mxu0 0.0
    %75 = vmatpush1.msra.mxu0 %v41
    %76 = vmatprep.subr.mxu0 0.0
    %77 = vmatpush1.msra.mxu0 %v40
    %78 = vmatprep.subr.mxu0 0.0
    %79 = vmatpush1.msra.mxu0 %v39
    %80 = vmatprep.subr.mxu0 0.0
    %81 = vmatpush1.msra.mxu0 %v38
    %82 = vmatprep.subr.mxu0 0.0
    %83 = vmatpush1.msra.mxu0 %v37
    %84 = vmatprep.subr.mxu0 0.0
    %85 = vmatpush1.msra.mxu0 %v36
    %86 = vmatprep.subr.mxu0 0.0
    %87 = vmatpush2.msra.mxu0 0.0
    %88 = vmatprep.subr.mxu0 0.0
    %89 = vmatpush2.msra.mxu0 0.0
    %90 = vmatprep.subr.mxu0 0.0
    %91 = vmatpush2.msra.mxu0 0.0
    %92 = vmatprep.subr.mxu0 0.0
    %93 = vmatpush2.msra.mxu0 0.0
    %94 = vmatprep.subr.mxu0 0.0
    %95 = vmatpush2.msra.mxu0 0.0
    %96 = vmatprep.subr.mxu0 0.0
    %97 = vmatpush2.msra.mxu0 0.0
    %98 = vmatprep.subr.mxu0 0.0
    %99 = vmatpush2.msra.mxu0 0.0
    %100 = vmatprep.subr.mxu0 0.0
    %101 = vmatpush2.msra.mxu0 0.0
    %102 = vmatprep.subr.mxu0 0.0
    %103 = vmatpush2.msra.mxu0 0.0
    %104 = vmatprep.subr.mxu0 0.0
    %105 = vmatpush2.msra.mxu0 0.0
    %106 = vmatprep.subr.mxu0 0.0
    %107 = vmatpush2.msra.mxu0 0.0
    %108 = vmatprep.subr.mxu0 0.0
    %109 = vmatpush2.msra.mxu0 0.0
    %110 = vmatprep.subr.mxu0 0.0
    %111 = vmatpush2.msra.mxu0 0.0
    %112 = vmatprep.subr.mxu0 0.0
    %113 = vmatpush2.msra.mxu0 0.0
    %114 = vmatprep.subr.mxu0 0.0
    %115 = vmatpush2.msra.mxu0 0.0
    %116 = vmatprep.subr.mxu0 0.0
    %117 = vmatpush2.msra.mxu0 0.0
    %118 = vmatprep.mubr.f32.mxu0 0.0
    %119 = vmatmul.mubr.f32.gmra.mxu0 %v35
    %v120 = vpop.f32.mrf.mxu0
    %v121 = vadd.f32 0.0, %v120
    %v122 = vpop.f32.mrf.mxu0
    %123 = vdwg.mxu0
    %v124 = vrot.slane %v121, 4
    %v125 = vadd.f32 %v121, %v124
    %v126 = vrot.slane %v125, 2
    %v127 = vadd.f32 %v125, %v126
    %v128 = vrot.slane %v127, 1
    %v129 = vadd.f32 %v127, %v128
    %v130 = vmul.f32 %v129, 0.125
    %v131 = vmul.f32 %v121, %v121
    %v132 = vrot.slane %v131, 4
    %v133 = vadd.f32 %v131, %v132
    %v134 = vrot.slane %v133, 2
    %v135 = vadd.f32 %v133, %v134
    %v136 = vrot.slane %v135, 1
    %v137 = vadd.f32 %v135, %v136
    %v138 = vmul.f32 %v137, 0.125
    %v139 = vmul.f32 %v130, %v130
    %v140 = vsub.f32 %v138, %v139
    %v141 = vadd.f32 %v140, 1e-05
    %v142 = vrsqrt.pop %v141
    %v143 = vmul.f32 %v52, %v142
    %v144 = vmul.f32 %v130, %v143
    %v145 = vsub.f32 %v53, %v144
    %v146 = vlaneseq
    %v147 = vshrl.u32 %v146, 7
    %v148 = vsub.s32 0, %v147
    %v149 = vrot.slane %v143, %v148
    %v150 = vmul.f32 %v121, %v149
    %v151 = vlaneseq
    %v152 = vshrl.u32 %v151, 7
    %v153 = vsub.s32 0, %v152
    %v154 = vrot.slane %v145, %v153
    %v155 = vadd.f32 %v150, %v154
    %v156 = vmax.f32 %v155, 0.0
    %s157 = scalar_lea.vmem [#allocation2], 128
    %v158 = vld [vmem:[%s157] sm:$0xff]
    %v159 = vld [vmem:[%s157 + $0x8] sm:$0xff]
    %v160 = vld [vmem:[%s157 + $0x10] sm:$0xff]
    %v161 = vld [vmem:[%s157 + $0x18] sm:$0xff]
    %v162 = vld [vmem:[%s157 + $0x20] sm:$0xff]
    %v163 = vld [vmem:[%s157 + $0x28] sm:$0xff]
    %v164 = vld [vmem:[%s157 + $0x30] sm:$0xff]
    %v165 = vld [vmem:[%s157 + $0x38] sm:$0xff]
    %v166 = vld [vmem:[%s157 + $0x40] sm:$0xff]
    %v167 = vld [vmem:[%s157 + $0x48] sm:$0xff]
    %v168 = vld [vmem:[%s157 + $0x50] sm:$0xff]
    %v169 = vld [vmem:[%s157 + $0x58] sm:$0xff]
    %v170 = vld [vmem:[%s157 + $0x60] sm:$0xff]
    %v171 = vld [vmem:[%s157 + $0x68] sm:$0xff]
    %v172 = vld [vmem:[%s157 + $0x70] sm:$0xff]
    %v173 = vld [vmem:[%s157 + $0x78] sm:$0xff]
    %v174 = vld [vmem:[%s2 + $0x2] sm:$0x1]
    %v175 = vld [vmem:[%s2 + $0x3] sm:$0x1]
    %176 = vmatprep.subr.mxu0 0.0
    %177 = vmatpush1.msra.mxu0 %v173
    %178 = vmatprep.subr.mxu0 0.0
    %179 = vmatpush1.msra.mxu0 %v172
    %180 = vmatprep.subr.mxu0 0.0
    %181 = vmatpush1.msra.mxu0 %v171
    %182 = vmatprep.subr.mxu0 0.0
    %183 = vmatpush1.msra.mxu0 %v170
    %184 = vmatprep.subr.mxu0 0.0
    %185 = vmatpush1.msra.mxu0 %v169
    %186 = vmatprep.subr.mxu0 0.0
    %187 = vmatpush1.msra.mxu0 %v168
    %188 = vmatprep.subr.mxu0 0.0
    %189 = vmatpush1.msra.mxu0 %v167
    %190 = vmatprep.subr.mxu0 0.0
    %191 = vmatpush1.msra.mxu0 %v166
    %192 = vmatprep.subr.mxu0 0.0
    %193 = vmatpush1.msra.mxu0 %v165
    %194 = vmatprep.subr.mxu0 0.0
    %195 = vmatpush1.msra.mxu0 %v164
    %196 = vmatprep.subr.mxu0 0.0
    %197 = vmatpush1.msra.mxu0 %v163
    %198 = vmatprep.subr.mxu0 0.0
    %199 = vmatpush1.msra.mxu0 %v162
    %200 = vmatprep.subr.mxu0 0.0
    %201 = vmatpush1.msra.mxu0 %v161
    %202 = vmatprep.subr.mxu0 0.0
    %203 = vmatpush1.msra.mxu0 %v160
    %204 = vmatprep.subr.mxu0 0.0
    %205 = vmatpush1.msra.mxu0 %v159
    %206 = vmatprep.subr.mxu0 0.0
    %207 = vmatpush1.msra.mxu0 %v158
    %208 = vmatprep.subr.mxu0 0.0
    %209 = vmatpush2.msra.mxu0 0.0
    %210 = vmatprep.subr.mxu0 0.0
    %211 = vmatpush2.msra.mxu0 0.0
    %212 = vmatprep.subr.mxu0 0.0
    %213 = vmatpush2.msra.mxu0 0.0
    %214 = vmatprep.subr.mxu0 0.0
    %215 = vmatpush2.msra.mxu0 0.0
    %216 = vmatprep.subr.mxu0 0.0
    %217 = vmatpush2.msra.mxu0 0.0
    %218 = vmatprep.subr.mxu0 0.0
    %219 = vmatpush2.msra.mxu0 0.0
    %220 = vmatprep.subr.mxu0 0.0
    %221 = vmatpush2.msra.mxu0 0.0
    %222 = vmatprep.subr.mxu0 0.0
    %223 = vmatpush2.msra.mxu0 0.0
    %224 = vmatprep.subr.mxu0 0.0
    %225 = vmatpush2.msra.mxu0 0.0
    %226 = vmatprep.subr.mxu0 0.0
    %227 = vmatpush2.msra.mxu0 0.0
    %228 = vmatprep.subr.mxu0 0.0
    %229 = vmatpush2.msra.mxu0 0.0
    %230 = vmatprep.subr.mxu0 0.0
    %231 = vmatpush2.msra.mxu0 0.0
    %232 = vmatprep.subr.mxu0 0.0
    %233 = vmatpush2.msra.mxu0 0.0
    %234 = vmatprep.subr.mxu0 0.0
    %235 = vmatpush2.msra.mxu0 0.0
    %236 = vmatprep.subr.mxu0 0.0
    %237 = vmatpush2.msra.mxu0 0.0
    %238 = vmatprep.subr.mxu0 0.0
    %239 = vmatpush2.msra.mxu0 0.0
    %240 = vmatprep.mubr.f32.mxu0 0.0
    %241 = vmatmul.mubr.f32.gmra.mxu0 %v156
    %v242 = vpop.f32.mrf.mxu0
    %v243 = vadd.f32 0.0, %v242
    %v244 = vpop.f32.mrf.mxu0
    %245 = vdwg.mxu0
    %v246 = vrot.slane %v243, 4
    %v247 = vadd.f32 %v243, %v246
    %v248 = vrot.slane %v247, 2
    %v249 = vadd.f32 %v247, %v248
    %v250 = vrot.slane %v249, 1
    %v251 = vadd.f32 %v249, %v250
    %v252 = vmul.f32 %v251, 0.125
    %v253 = vmul.f32 %v243, %v243
    %v254 = vrot.slane %v253, 4
    %v255 = vadd.f32 %v253, %v254
    %v256 = vrot.slane %v255, 2
    %v257 = vadd.f32 %v255, %v256
    %v258 = vrot.slane %v257, 1
    %v259 = vadd.f32 %v257, %v258
    %v260 = vmul.f32 %v259, 0.125
    %v261 = vmul.f32 %v252, %v252
    %v262 = vsub.f32 %v260, %v261
    %v263 = vadd.f32 %v262, 1e-05
    %v264 = vrsqrt.pop %v263
    %v265 = vmul.f32 %v174, %v264
    %v266 = vmul.f32 %v252, %v265
    %v267 = vsub.f32 %v175, %v266
    %v268 = vlaneseq
    %v269 = vshrl.u32 %v268, 7
    %v270 = vsub.s32 0, %v269
    %v271 = vrot.slane %v265, %v270
    %v272 = vmul.f32 %v243, %v271
    %v273 = vlaneseq
    %v274 = vshrl.u32 %v273, 7
    %v275 = vsub.s32 0, %v274
    %v276 = vrot.slane %v267, %v275
    %v277 = vadd.f32 %v272, %v276
    %v278 = vmax.f32 %v277, 0.0
    %v279 = vld [vmem:[%s3] sm:$0xff]
    %v280 = vld [vmem:[%s3 + $0x8] sm:$0xff]
    %v281 = vld [vmem:[%s3 + $0x10] sm:$0xff]
    %v282 = vld [vmem:[%s3 + $0x18] sm:$0xff]
    %v283 = vld [vmem:[%s3 + $0x20] sm:$0xff]
    %v284 = vld [vmem:[%s3 + $0x28] sm:$0xff]
    %v285 = vld [vmem:[%s3 + $0x30] sm:$0xff]
    %v286 = vld [vmem:[%s3 + $0x38] sm:$0xff]
    %v287 = vld [vmem:[%s3 + $0x40] sm:$0xff]
    %v288 = vld [vmem:[%s3 + $0x48] sm:$0xff]
    %v289 = vld [vmem:[%s3 + $0x50] sm:$0xff]
    %v290 = vld [vmem:[%s3 + $0x58] sm:$0xff]
    %v291 = vld [vmem:[%s3 + $0x60] sm:$0xff]
    %v292 = vld [vmem:[%s3 + $0x68] sm:$0xff]
    %v293 = vld [vmem:[%s3 + $0x70] sm:$0xff]
    %v294 = vld [vmem:[%s3 + $0x78] sm:$0xff]
    %v295 = vld [vmem:[%s4] sm:$0x1]
    %v297 = vlaneseq
    %v298 = vshrl.u32 %v297, 7
    %v299 = vsub.s32 0, %v298
    %v300 = vrot.slane %v295, %v299
    %302 = vmatprep.subr.mxu0 0.0
    %303 = vmatpush1.msra.mxu0 %v294
    %304 = vmatprep.subr.mxu0 0.0
    %305 = vmatpush1.msra.mxu0 %v293
    %306 = vmatprep.subr.mxu0 0.0
    %307 = vmatpush1.msra.mxu0 %v292
    %308 = vmatprep.subr.mxu0 0.0
    %309 = vmatpush1.msra.mxu0 %v291
    %310 = vmatprep.subr.mxu0 0.0
    %311 = vmatpush1.msra.mxu0 %v290
    %312 = vmatprep.subr.mxu0 0.0
    %313 = vmatpush1.msra.mxu0 %v289
    %314 = vmatprep.subr.mxu0 0.0
    %315 = vmatpush1.msra.mxu0 %v288
    %316 = vmatprep.subr.mxu0 0.0
    %317 = vmatpush1.msra.mxu0 %v287
    %318 = vmatprep.subr.mxu0 0.0
    %319 = vmatpush1.msra.mxu0 %v286
    %320 = vmatprep.subr.mxu0 0.0
    %321 = vmatpush1.msra.mxu0 %v285
    %322 = vmatprep.subr.mxu0 0.0
    %323 = vmatpush1.msra.mxu0 %v284
    %324 = vmatprep.subr.mxu0 0.0
    %325 = vmatpush1.msra.mxu0 %v283
    %326 = vmatprep.subr.mxu0 0.0
    %327 = vmatpush1.msra.mxu0 %v282
    %328 = vmatprep.subr.mxu0 0.0
    %329 = vmatpush1.msra.mxu0 %v281
    %330 = vmatprep.subr.mxu0 0.0
    %331 = vmatpush1.msra.mxu0 %v280
    %332 = vmatprep.subr.mxu0 0.0
    %333 = vmatpush1.msra.mxu0 %v279
    %334 = vmatprep.subr.mxu0 0.0
    %335 = vmatpush2.msra.mxu0 0.0
    %336 = vmatprep.subr.mxu0 0.0
    %337 = vmatpush2.msra.mxu0 0.0
    %338 = vmatprep.subr.mxu0 0.0
    %339 = vmatpush2.msra.mxu0 0.0
    %340 = vmatprep.subr.mxu0 0.0
    %341 = vmatpush2.msra.mxu0 0.0
    %342 = vmatprep.subr.mxu0 0.0
    %343 = vmatpush2.msra.mxu0 0.0
    %344 = vmatprep.subr.mxu0 0.0
    %345 = vmatpush2.msra.mxu0 0.0
    %346 = vmatprep.subr.mxu0 0.0
    %347 = vmatpush2.msra.mxu0 0.0
    %348 = vmatprep.subr.mxu0 0.0
    %349 = vmatpush2.msra.mxu0 0.0
    %350 = vmatprep.subr.mxu0 0.0
    %351 = vmatpush2.msra.mxu0 0.0
    %352 = vmatprep.subr.mxu0 0.0
    %353 = vmatpush2.msra.mxu0 0.0
    %354 = vmatprep.subr.mxu0 0.0
    %355 = vmatpush2.msra.mxu0 0.0
    %356 = vmatprep.subr.mxu0 0.0
    %357 = vmatpush2.msra.mxu0 0.0
    %358 = vmatprep.subr.mxu0 0.0
    %359 = vmatpush2.msra.mxu0 0.0
    %360 = vmatprep.subr.mxu0 0.0
    %361 = vmatpush2.msra.mxu0 0.0
    %362 = vmatprep.subr.mxu0 0.0
    %363 = vmatpush2.msra.mxu0 0.0
    %364 = vmatprep.subr.mxu0 0.0
    %365 = vmatpush2.msra.mxu0 0.0
    %366 = vmatprep.mubr.f32.mxu0 0.0
    %367 = vmatmul.mubr.f32.gmra.mxu0 %v278
    %v368 = vpop.f32.mrf.mxu0
    %v369 = vadd.f32 %v300, %v368
    %v370 = vpop.f32.mrf.mxu0
    %371 = vdwg.mxu0
    %vm372 = vcmask 130048
    %373 = vst.msk [vmem:[#allocation5] sm:$0xff] %vm372, %v369
    // Predicated region
    $region26: #{_fused_forward.1} parent=1 // pred_check
      _
    $region27: #{_fused_forward.1} parent=1 // pred_check_branch
      %375 = sbr.rel (0) target = $region29
    $region28: #{_fused_forward.1} parent=1 // pred_region
      %s377 = ssub.s32 128, 128
      %378 = vsyncadd [#allocation4], %s377
      %s380 = sshll.u32 [#allocation5], 4
      %s381 = int_to_ptr.vmem [resolvable:$true] %s380
      %383 = dma.vmem_to_hbm [thread:$0]  %s381, 128, %s5, [#allocation4]
    $region29: #{_fused_forward.1} parent=1 // pred_fallthru
      _
    // Predicated region
    $region30: #{_fused_forward.1} parent=1 // pred_check
      _
    $region31: #{_fused_forward.1} parent=1 // pred_check_branch
      %385 = sbr.rel (0) target = $region33
    $region32: #{_fused_forward.1} parent=1 // pred_region
      %386 = dma.done [#allocation4], 128
    $region33: #{_fused_forward.1} parent=1 // pred_fallthru
      _
    %387 = vsyncpa [#allocation3], 1
    %388 = vsyncpa [#allocation4], 1

</llo_original>
